<compile_context>
chip_gen: v5e
topology: v5e:2x2
jax: 0.10.0
libtpu: 0.0.40
codegen_flags: <defaults>
</compile_context>

<pallas_src>
import functools
from typing import NamedTuple

import jax
import jax.numpy as jnp
from jax.experimental import pallas as pl
from jax.experimental.pallas import tpu as pltpu


def _round_up(x: int, m: int) -> int:
    return (x + m - 1) // m * m


def _cdiv(a: int, b: int) -> int:
    return (a + b - 1) // b


def _tpu_generation() -> int:
    """Best-effort TPU generation detection (0 = unknown -> conservative defaults)."""
    try:
        kind = jax.devices()[0].device_kind.lower()
    except Exception:
        return 0
    for g in (7, 6, 5, 4):
        if f"v{g}" in kind:
            return g
    return 0


# ----------------------------------------------------------------------------
# Kernel
# ----------------------------------------------------------------------------
def _encoder_kernel(x_ref, w1_ref, b1_ref, w2_ref, b2_ref, eps_ref, out_ref,
                    *, l_pad: int):
    # x:   [TB, Din_p]   bf16         w1: [Din_p, H_p]  bf16    b1: [1, H_p]    f32
    # w2:  [H_p, 2*L_p]  bf16 (fused [wmu | wvar])              b2: [1, 2*L_p]  f32
    # eps: [TB, L_p]     bf16
    # out: [TB, 3*L_p]   f32 slab = [ mu | log_var | z ]
    x = x_ref[...]

    # hidden layer: bf16 MXU, f32 accumulate, f32 bias + ReLU, recast for MXU
    h = jnp.dot(x, w1_ref[...], preferred_element_type=jnp.float32) + b1_ref[...]
    h = jnp.maximum(h, 0.0).astype(w2_ref.dtype)

    # fused (mu | log_var) projection
    mv = jnp.dot(h, w2_ref[...], preferred_element_type=jnp.float32) + b2_ref[...]
    mu = mv[:, :l_pad]            # lane-aligned slices (L_p is a multiple of 128)
    log_var = mv[:, l_pad:]

    # reparameterization: z = mu + exp(log_var / 2) * eps    (f32 epilogue)
    z = mu + jnp.exp(log_var * 0.5) * eps_ref[...].astype(jnp.float32)

    # one wide, lane-dense output slab
    out_ref[:, : 2 * l_pad] = mv
    out_ref[:, 2 * l_pad:] = z


# ----------------------------------------------------------------------------
# One-time weight prepacking (padding + bf16 cast + mu|var fusion)
# ----------------------------------------------------------------------------
class EncoderParams(NamedTuple):
    w1: jax.Array        # [Din_p, H_p]   bf16
    b1: jax.Array        # [1, H_p]       f32
    w2: jax.Array        # [H_p, 2*L_p]   bf16  (fused [wmu | wvar])
    b2: jax.Array        # [1, 2*L_p]     f32   (fused [bmu | bvar])
    input_dim: int
    hidden_dim: int
    latent_dim: int
    l_pad: int


def prepack_encoder_params(w1, b1, wmu, bmu, wvar, bvar) -> EncoderParams:
    """Pad / cast / fuse the Encoder weights once; reuse across forward calls.

    Weights are [in, out]; biases are [out] or [1, out].
    """
    f32, bf16 = jnp.float32, jnp.bfloat16
    input_dim, hidden_dim = w1.shape
    latent_dim = wmu.shape[1]

    gen = _tpu_generation()
    # v6e / v7x MXUs are 2x256x256 -> fill N=256 on the first matmul when the
    # real hidden_dim justifies it; v5e (4x128x128) / unknown keep 128-rounding.
    h_mult = 256 if (gen >= 6 and hidden_dim > 128) else 128

    din_p = _round_up(input_dim, 128)
    h_p = _round_up(hidden_dim, h_mult)
    l_p = _round_up(latent_dim, 128)

    b1 = jnp.asarray(b1, f32).reshape(1, -1)
    bmu = jnp.asarray(bmu, f32).reshape(1, -1)
    bvar = jnp.asarray(bvar, f32).reshape(1, -1)

    w1_p = jnp.zeros((din_p, h_p), bf16).at[:input_dim, :hidden_dim].set(w1.astype(bf16))
    b1_p = jnp.zeros((1, h_p), f32).at[:, :hidden_dim].set(b1)
    w2_p = (jnp.zeros((h_p, 2 * l_p), bf16)
            .at[:hidden_dim, :latent_dim].set(wmu.astype(bf16))
            .at[:hidden_dim, l_p:l_p + latent_dim].set(wvar.astype(bf16)))
    b2_p = (jnp.zeros((1, 2 * l_p), f32)
            .at[:, :latent_dim].set(bmu)
            .at[:, l_p:l_p + latent_dim].set(bvar))

    return EncoderParams(w1_p, b1_p, w2_p, b2_p, input_dim, hidden_dim, latent_dim, l_p)


# ----------------------------------------------------------------------------
# Forward
# ----------------------------------------------------------------------------
def encoder_forward(x, eps, params: EncoderParams, *, block_b=None):
    """VAE encoder forward. Returns (mu, log_var, z), each [B, latent_dim] f32."""
    f32, bf16 = jnp.float32, jnp.bfloat16
    B, input_dim = x.shape
    assert input_dim == params.input_dim
    latent_dim = params.latent_dim
    din_p, h_p = params.w1.shape
    l_p = params.l_pad

    gen = _tpu_generation()
    if block_b is None:
        # v5e / v6e have 128 MiB VMEM -> large batch tiles; v7x only 64 MiB/TC.
        block_b = 2048 if gen in (5, 6) else 512

    # Batch tiling: at least one tile per TensorCore (v7x has 2 TCs so the
    # "parallel" batch axis can be sharded), and size the tile from
    # ceil(B / n_tiles) so batch padding stays small near tile boundaries.
    num_cores = 2 if gen >= 7 else 1
    min_tiles = num_cores if B >= 8 * num_cores else 1
    n_tiles = max(min_tiles, _cdiv(B, block_b))
    tb = min(block_b, _round_up(_cdiv(B, n_tiles), 8))
    b_p = _round_up(B, tb)
    grid = (b_p // tb,)

    # Per-call padding of activations only (weights were prepacked).
    x_p = jnp.zeros((b_p, din_p), bf16).at[:B, :input_dim].set(x.astype(bf16))
    eps_p = jnp.zeros((b_p, l_p), bf16).at[:B, :latent_dim].set(eps.astype(bf16))

    def row_spec(d):                 # batch-tiled, auto double-buffered
        return pl.BlockSpec((tb, d), lambda i: (i, 0))

    def resident_spec(r, c):         # constant index_map -> stays put in VMEM
        return pl.BlockSpec((r, c), lambda i: (0, 0))

    out_shape = jax.ShapeDtypeStruct((b_p, 3 * l_p), f32)   # [mu | log_var | z]

    # Advisory cost estimate for the XLA scheduler.
    flops = 2 * b_p * (din_p * h_p + h_p * 2 * l_p)
    bytes_accessed = (x_p.size * 2 + eps_p.size * 2
                      + params.w1.size * 2 + params.b1.size * 4
                      + params.w2.size * 2 + params.b2.size * 4
                      + b_p * 3 * l_p * 4)
    cost = pl.CostEstimate(flops=flops, transcendentals=b_p * l_p,
                           bytes_accessed=bytes_accessed)

    # VMEM budget: double-buffered resident weights + double-buffered per-tile
    # x/eps/out streams + f32 intermediates, with headroom; generation cap.
    weight_bytes = ((params.w1.size + params.w2.size) * 2
                    + (params.b1.size + params.b2.size) * 4)
    tile_bytes = tb * (din_p * 2 + l_p * 2 + 3 * l_p * 4)
    interm_bytes = tb * (h_p + 2 * l_p) * 4
    cap = (100 << 20) if gen in (5, 6) else (48 << 20)
    vmem_limit = int(min(max(2 * (2 * weight_bytes + 2 * tile_bytes + interm_bytes),
                             8 << 20), cap))

    kernel = functools.partial(_encoder_kernel, l_pad=l_p)

    out = pl.pallas_call(
        kernel,
        out_shape=out_shape,
        grid=grid,
        in_specs=[
            row_spec(din_p),                     # x   (batch-tiled, pipelined)
            resident_spec(din_p, h_p),           # w1
            resident_spec(1, h_p),               # b1
            resident_spec(h_p, 2 * l_p),         # w2 = [wmu | wvar]
            resident_spec(1, 2 * l_p),           # b2 = [bmu | bvar]
            row_spec(l_p),                       # eps (batch-tiled, pipelined)
        ],
        out_specs=row_spec(3 * l_p),
        compiler_params=pltpu.CompilerParams(
            dimension_semantics=("parallel",),   # batch tiles are independent
            vmem_limit_bytes=vmem_limit,
        ),
        cost_estimate=cost,
    )(x_p, params.w1, params.b1, params.w2, params.b2, eps_p)

    # Strip batch / lane padding and split the slab.
    mu = out[:B, :latent_dim]
    log_var = out[:B, l_p:l_p + latent_dim]
    z = out[:B, 2 * l_p:2 * l_p + latent_dim]
    return mu, log_var, z


# ----------------------------------------------------------------------------
# Parameter init (mirrors nn.Linear, stored pre-transposed [in, out])
# ----------------------------------------------------------------------------
def init_params(key, input_dim, hidden_dim, latent_dim):
    ks = jax.random.split(key, 6)

    def linear(kw, kb, fan_in, fan_out):
        bound = 1.0 / jnp.sqrt(fan_in)
        w = jax.random.uniform(kw, (fan_in, fan_out), jnp.float32, -bound, bound)
        b = jax.random.uniform(kb, (1, fan_out), jnp.float32, -bound, bound)
        return w, b

    w1, b1 = linear(ks[0], ks[1], input_dim, hidden_dim)
    wmu, bmu = linear(ks[2], ks[3], hidden_dim, latent_dim)
    wvar, bvar = linear(ks[4], ks[5], hidden_dim, latent_dim)
    return w1, b1, wmu, bmu, wvar, bvar


if __name__ == "__main__":
    # Small shapes consistent with the module's forward: x is [batch, input_dim].
    batch, input_dim, hidden_dim, latent_dim = 8, 32, 32, 16

    key = jax.random.PRNGKey(0)
    k_param, k_x, k_eps = jax.random.split(key, 3)

    w1, b1, wmu, bmu, wvar, bvar = init_params(k_param, input_dim, hidden_dim, latent_dim)
    x = jax.random.normal(k_x, (batch, input_dim), jnp.float32)
    eps = jax.random.normal(k_eps, (batch, latent_dim), jnp.float32)

    # One-time weight prepack, then the forward pass.
    params = prepack_encoder_params(w1, b1, wmu, bmu, wvar, bvar)
    mu, log_var, z = encoder_forward(x, eps, params)
    jax.block_until_ready((mu, log_var, z))

    # Pure-JAX reference with the same bf16-operand / f32-accumulate matmuls
    # and the same bf16-rounded eps.
    bf16, f32 = jnp.bfloat16, jnp.float32
    h_ref = jnp.maximum(
        jnp.dot(x.astype(bf16), w1.astype(bf16), preferred_element_type=f32) + b1, 0.0)
    hb = h_ref.astype(bf16)
    mu_ref = jnp.dot(hb, wmu.astype(bf16), preferred_element_type=f32) + bmu
    lv_ref = jnp.dot(hb, wvar.astype(bf16), preferred_element_type=f32) + bvar
    eps_b = eps.astype(bf16).astype(f32)
    z_ref = mu_ref + jnp.exp(lv_ref / 2.0) * eps_b

    assert jnp.allclose(mu, mu_ref, atol=2e-3, rtol=2e-3)
    assert jnp.allclose(log_var, lv_ref, atol=2e-3, rtol=2e-3)
    assert jnp.allclose(z, z_ref, atol=2e-3, rtol=2e-3)

    print("KERNEL_OK")
</pallas_src>

<mosaic_0001>
module attributes {stable_mosaic.version = 11 : i64} {
  func.func @_encoder_kernel(%arg0: i32, %arg1: memref<8x128xbf16, #tpu.memory_space<vmem>>, %arg2: memref<128x128xbf16, #tpu.memory_space<vmem>>, %arg3: memref<1x128xf32, #tpu.memory_space<vmem>>, %arg4: memref<128x256xbf16, #tpu.memory_space<vmem>>, %arg5: memref<1x256xf32, #tpu.memory_space<vmem>>, %arg6: memref<8x128xbf16, #tpu.memory_space<vmem>>, %arg7: memref<8x384xf32, #tpu.memory_space<vmem>>) attributes {dimension_semantics = [#tpu.dimension_semantics<parallel>], iteration_bounds = array<i64: 1>, scalar_prefetch = 0 : i64, scratch_operands = 0 : i64, tpu.core_type = #tpu.core_type<tc>, window_params = [{transform_indices = @transform_0, window_bounds = array<i64: 8, 128>}, {pipeline_mode = #tpu.pipeline_mode<synchronous>, transform_indices = @transform_1, window_bounds = array<i64: 128, 128>}, {pipeline_mode = #tpu.pipeline_mode<synchronous>, transform_indices = @transform_2, window_bounds = array<i64: 1, 128>}, {pipeline_mode = #tpu.pipeline_mode<synchronous>, transform_indices = @transform_3, window_bounds = array<i64: 128, 256>}, {pipeline_mode = #tpu.pipeline_mode<synchronous>, transform_indices = @transform_4, window_bounds = array<i64: 1, 256>}, {transform_indices = @transform_5, window_bounds = array<i64: 8, 128>}, {transform_indices = @transform_6, window_bounds = array<i64: 8, 384>}]} {
    %c0 = arith.constant 0 : index
    %c0_0 = arith.constant 0 : index
    %0 = vector.load %arg1[%c0, %c0_0] : memref<8x128xbf16, #tpu.memory_space<vmem>>, vector<8x128xbf16>
    %c0_1 = arith.constant 0 : index
    %c0_2 = arith.constant 0 : index
    %1 = vector.load %arg2[%c0_1, %c0_2] : memref<128x128xbf16, #tpu.memory_space<vmem>>, vector<128x128xbf16>
    %cst = arith.constant dense<0.000000e+00> : vector<8x128xf32>
    %2 = tpu.matmul %0, %1, %cst {dimension_numbers = #tpu.dot_dimension_numbers<[1], [0], [0], [1], [0, 0, 1, 1], [], []>} : vector<8x128xbf16>, vector<128x128xbf16>, vector<8x128xf32> -> vector<8x128xf32>
    %c0_3 = arith.constant 0 : index
    %c0_4 = arith.constant 0 : index
    %3 = vector.load %arg3[%c0_3, %c0_4] : memref<1x128xf32, #tpu.memory_space<vmem>>, vector<1x128xf32>
    %4 = vector.broadcast %3 : vector<1x128xf32> to vector<8x128xf32>
    %5 = arith.addf %2, %4 : vector<8x128xf32>
    %cst_5 = arith.constant 0.000000e+00 : f32
    %6 = vector.broadcast %cst_5 : f32 to vector<8x128xf32>
    %7 = arith.maximumf %5, %6 : vector<8x128xf32>
    %8 = arith.truncf %7 : vector<8x128xf32> to vector<8x128xbf16>
    %c0_6 = arith.constant 0 : index
    %c0_7 = arith.constant 0 : index
    %9 = vector.load %arg4[%c0_6, %c0_7] : memref<128x256xbf16, #tpu.memory_space<vmem>>, vector<128x256xbf16>
    %cst_8 = arith.constant dense<0.000000e+00> : vector<8x256xf32>
    %10 = tpu.matmul %8, %9, %cst_8 {dimension_numbers = #tpu.dot_dimension_numbers<[1], [0], [0], [1], [0, 0, 1, 1], [], []>} : vector<8x128xbf16>, vector<128x256xbf16>, vector<8x256xf32> -> vector<8x256xf32>
    %c0_9 = arith.constant 0 : index
    %c0_10 = arith.constant 0 : index
    %11 = vector.load %arg5[%c0_9, %c0_10] : memref<1x256xf32, #tpu.memory_space<vmem>>, vector<1x256xf32>
    %12 = vector.broadcast %11 : vector<1x256xf32> to vector<8x256xf32>
    %13 = arith.addf %10, %12 : vector<8x256xf32>
    %14 = vector.extract_strided_slice %13 {offsets = [0, 0], sizes = [8, 128], strides = [1, 1]} : vector<8x256xf32> to vector<8x128xf32>
    %15 = vector.extract_strided_slice %13 {offsets = [0, 128], sizes = [8, 128], strides = [1, 1]} : vector<8x256xf32> to vector<8x128xf32>
    %cst_11 = arith.constant 5.000000e-01 : f32
    %16 = vector.broadcast %cst_11 : f32 to vector<8x128xf32>
    %17 = arith.mulf %15, %16 : vector<8x128xf32>
    %18 = math.exp %17 : vector<8x128xf32>
    %c0_12 = arith.constant 0 : index
    %c0_13 = arith.constant 0 : index
    %19 = vector.load %arg6[%c0_12, %c0_13] : memref<8x128xbf16, #tpu.memory_space<vmem>>, vector<8x128xbf16>
    %20 = arith.extf %19 : vector<8x128xbf16> to vector<8x128xf32>
    %21 = arith.mulf %18, %20 : vector<8x128xf32>
    %22 = arith.addf %14, %21 : vector<8x128xf32>
    %c0_14 = arith.constant 0 : index
    %c0_15 = arith.constant 0 : index
    %23 = vector.load %arg7[%c0_14, %c0_15] : memref<8x384xf32, #tpu.memory_space<vmem>>, vector<8x256xf32>
    tpu.vector_store %arg7[%c0_14, %c0_15], %13 {strides = array<i32>} : memref<8x384xf32, #tpu.memory_space<vmem>>, vector<8x256xf32>,
    %c0_16 = arith.constant 0 : index
    %c256 = arith.constant 256 : index
    %24 = vector.load %arg7[%c0_16, %c256] : memref<8x384xf32, #tpu.memory_space<vmem>>, vector<8x128xf32>
    tpu.vector_store %arg7[%c0_16, %c256], %22 {strides = array<i32>} : memref<8x384xf32, #tpu.memory_space<vmem>>, vector<8x128xf32>,
    return
  }
  func.func @transform_0(%arg0: i32) -> (i32, i32) {
    %c0_i32 = arith.constant 0 : i32
    %c0_i32_0 = arith.constant 0 : i32
    return %arg0, %c0_i32 : i32, i32
  }
  func.func @transform_1(%arg0: i32) -> (i32, i32) {
    %c0_i32 = arith.constant 0 : i32
    %c0_i32_0 = arith.constant 0 : i32
    %c0_i32_1 = arith.constant 0 : i32
    return %c0_i32, %c0_i32_0 : i32, i32
  }
  func.func @transform_2(%arg0: i32) -> (i32, i32) {
    %c0_i32 = arith.constant 0 : i32
    %c0_i32_0 = arith.constant 0 : i32
    %c0_i32_1 = arith.constant 0 : i32
    return %c0_i32, %c0_i32_0 : i32, i32
  }
  func.func @transform_3(%arg0: i32) -> (i32, i32) {
    %c0_i32 = arith.constant 0 : i32
    %c0_i32_0 = arith.constant 0 : i32
    %c0_i32_1 = arith.constant 0 : i32
    return %c0_i32, %c0_i32_0 : i32, i32
  }
  func.func @transform_4(%arg0: i32) -> (i32, i32) {
    %c0_i32 = arith.constant 0 : i32
    %c0_i32_0 = arith.constant 0 : i32
    %c0_i32_1 = arith.constant 0 : i32
    return %c0_i32, %c0_i32_0 : i32, i32
  }
  func.func @transform_5(%arg0: i32) -> (i32, i32) {
    %c0_i32 = arith.constant 0 : i32
    %c0_i32_0 = arith.constant 0 : i32
    return %arg0, %c0_i32 : i32, i32
  }
  func.func @transform_6(%arg0: i32) -> (i32, i32) {
    %c0_i32 = arith.constant 0 : i32
    %c0_i32_0 = arith.constant 0 : i32
    return %arg0, %c0_i32 : i32, i32
  }
}

</mosaic_0001>

<llo_original>
// kernel: tpu_custom_call.1
$region0: #{tpu_custom_call.1}
  #allocation0 [shape = 'u32[]', space=smem, size = 0x4, offset = 0x4, fixed_abs, tag = 'smem constant byte address 0x4 - core index']
  #allocation1 [shape = 'u32[72,128]{1,0:T(1,128)}', space=vmem, size = 0x9000, scoped, tag = 'internal scratch']
  %s0 = inlined_call_operand.hbm [shape: bf16[8,128], index: 0, kind: input, shape index: {}]
  %s1 = inlined_call_operand.hbm [shape: bf16[128,128], index: 1, kind: input, shape index: {}]
  %s2 = inlined_call_operand.hbm [shape: f32[1,128], index: 2, kind: input, shape index: {}]
  %s3 = inlined_call_operand.hbm [shape: bf16[128,256], index: 3, kind: input, shape index: {}]
  %s4 = inlined_call_operand.hbm [shape: f32[1,256], index: 4, kind: input, shape index: {}]
  %s5 = inlined_call_operand.vmem [shape: bf16[8,128], index: 5, kind: input, shape index: {}]
  %s6 = inlined_call_operand.hbm [shape: f32[8,384], index: 6, kind: output, shape index: {}]
  %s7 = sld [smem:[#allocation0]]
  $region54: #{tpu_custom_call.1} parent=0
    _
  %s9 = ssub.s32 1, %s7
  %s10 = scalar_select 0, %s9, %s7
  $region1: #{tpu_custom_call.1} parent=0
    #allocation2 [shape = 'u8[2048]{0}', space=vmem, size = 0x800, scoped, tag = 'input window, operand 0, single buffered']
    #allocation3 [shape = 's32[1]{0}', space=sflag, size = 0x4, scoped, tag = 'scoped memory for tpu_custom_call.1']
    #allocation4 [shape = 's32[1]{0}', space=sflag, size = 0x4, scoped, tag = 'scoped memory for tpu_custom_call.1']
    #allocation5 [shape = 'u8[32768]{0}', space=vmem, size = 0x8000, scoped, tag = 'input window, operand 1, single buffered']
    #allocation6 [shape = 's32[1]{0}', space=sflag, size = 0x4, scoped, tag = 'scoped memory for tpu_custom_call.1']
    #allocation7 [shape = 'u8[512]{0}', space=vmem, size = 0x400, scoped, tag = 'input window, operand 2, single buffered']
    #allocation8 [shape = 'u8[65536]{0}', space=vmem, size = 0x10000, scoped, tag = 'input window, operand 3, single buffered']
    #allocation9 [shape = 's32[1]{0}', space=sflag, size = 0x4, scoped, tag = 'scoped memory for tpu_custom_call.1']
    #allocation10 [shape = 'u8[1024]{0}', space=vmem, size = 0x400, scoped, tag = 'input window, operand 4, single buffered']
    #allocation11 [shape = 'u8[12288]{0}', space=vmem, size = 0x3000, scoped, tag = 'output window, operand 0, single buffered']
    %11 = vsyncpa [#allocation3], 0
    %12 = vsyncpa [#allocation6], 0
    %13 = vsyncpa [#allocation9], 0
    %14 = vsyncpa [#allocation4], 0
    // Predicated region
    $region2: #{tpu_custom_call.1} parent=1 // pred_check
      _
    $region3: #{tpu_custom_call.1} parent=1 // pred_check_branch
      %16 = sbr.rel (0) target = $region5
    $region4: #{tpu_custom_call.1} parent=1 // pred_region
      %18 = vsyncadd [#allocation3], 0
      %s20 = sshll.u32 %s0, 4
      %s21 = int_to_ptr.hbm [resolvable:$true] %s20
      %s22 = sshll.u32 [#allocation2], 4
      %s23 = int_to_ptr.vmem [resolvable:$true] %s22
      %25 = dma.hbm_to_vmem [thread:$0]  %s21, 64, %s23, [#allocation3]
    $region5: #{tpu_custom_call.1} parent=1 // pred_fallthru
      _
    // Predicated region
    $region6: #{tpu_custom_call.1} parent=1 // pred_check
      _
    $region7: #{tpu_custom_call.1} parent=1 // pred_check_branch
      %27 = sbr.rel (0) target = $region9
    $region8: #{tpu_custom_call.1} parent=1 // pred_region
      %29 = vsyncadd [#allocation6], 0
      %s30 = sshll.u32 %s1, 4
      %s31 = int_to_ptr.hbm [resolvable:$true] %s30
      %s32 = sshll.u32 [#allocation5], 4
      %s33 = int_to_ptr.vmem [resolvable:$true] %s32
      %38 = dma.hbm_to_vmem [thread:$0]  %s31, 1024, %s33, [#allocation6], 64, 64, 4
    $region9: #{tpu_custom_call.1} parent=1 // pred_fallthru
      _
    // Predicated region
    $region10: #{tpu_custom_call.1} parent=1 // pred_check
      _
    $region11: #{tpu_custom_call.1} parent=1 // pred_check_branch
      %40 = sbr.rel (0) target = $region13
    $region12: #{tpu_custom_call.1} parent=1 // pred_region
      %42 = vsyncadd [#allocation6], 0
      %s44 = sshll.u32 %s2, 4
      %s45 = int_to_ptr.hbm [resolvable:$true] %s44
      %s46 = sshll.u32 [#allocation7], 4
      %s47 = int_to_ptr.vmem [resolvable:$true] %s46
      %49 = dma.hbm_to_vmem [thread:$0]  %s45, 16, %s47, [#allocation6]
    $region13: #{tpu_custom_call.1} parent=1 // pred_fallthru
      _
    // Predicated region
    $region14: #{tpu_custom_call.1} parent=1 // pred_check
      _
    $region15: #{tpu_custom_call.1} parent=1 // pred_check_branch
      %51 = sbr.rel (0) target = $region17
    $region16: #{tpu_custom_call.1} parent=1 // pred_region
      %53 = vsyncadd [#allocation9], 0
      %s54 = sshll.u32 %s3, 4
      %s55 = int_to_ptr.hbm [resolvable:$true] %s54
      %s56 = sshll.u32 [#allocation8], 4
      %s57 = int_to_ptr.vmem [resolvable:$true] %s56
      %62 = dma.hbm_to_vmem [thread:$0]  %s55, 2048, %s57, [#allocation9], 128, 128, 8
    $region17: #{tpu_custom_call.1} parent=1 // pred_fallthru
      _
    // Predicated region
    $region18: #{tpu_custom_call.1} parent=1 // pred_check
      _
    $region19: #{tpu_custom_call.1} parent=1 // pred_check_branch
      %64 = sbr.rel (0) target = $region21
    $region20: #{tpu_custom_call.1} parent=1 // pred_region
      %66 = vsyncadd [#allocation9], 0
      %s68 = sshll.u32 %s4, 4
      %s69 = int_to_ptr.hbm [resolvable:$true] %s68
      %s70 = sshll.u32 [#allocation10], 4
      %s71 = int_to_ptr.vmem [resolvable:$true] %s70
      %73 = dma.hbm_to_vmem [thread:$0]  %s69, 32, %s71, [#allocation9]
    $region21: #{tpu_custom_call.1} parent=1 // pred_fallthru
      _
    // Predicated region
    $region22: #{tpu_custom_call.1} parent=1 // pred_check
      _
    $region23: #{tpu_custom_call.1} parent=1 // pred_check_branch
      %75 = sbr.rel (0) target = $region25
    $region24: #{tpu_custom_call.1} parent=1 // pred_region
      _
    $region25: #{tpu_custom_call.1} parent=1 // pred_fallthru
      _
    // Predicated region
    $region26: #{tpu_custom_call.1} parent=1 // pred_check
      _
    $region27: #{tpu_custom_call.1} parent=1 // pred_check_branch
      %77 = sbr.rel (0) target = $region29
    $region28: #{tpu_custom_call.1} parent=1 // pred_region
      %79 = dma.done [#allocation3], 64
    $region29: #{tpu_custom_call.1} parent=1 // pred_fallthru
      _
    // Predicated region
    $region30: #{tpu_custom_call.1} parent=1 // pred_check
      _
    $region31: #{tpu_custom_call.1} parent=1 // pred_check_branch
      %81 = sbr.rel (0) target = $region33
    $region32: #{tpu_custom_call.1} parent=1 // pred_region
      %83 = dma.done [#allocation6], 1024
    $region33: #{tpu_custom_call.1} parent=1 // pred_fallthru
      _
    // Predicated region
    $region34: #{tpu_custom_call.1} parent=1 // pred_check
      _
    $region35: #{tpu_custom_call.1} parent=1 // pred_check_branch
      %85 = sbr.rel (0) target = $region37
    $region36: #{tpu_custom_call.1} parent=1 // pred_region
      %87 = dma.done [#allocation6], 16
    $region37: #{tpu_custom_call.1} parent=1 // pred_fallthru
      _
    // Predicated region
    $region38: #{tpu_custom_call.1} parent=1 // pred_check
      _
    $region39: #{tpu_custom_call.1} parent=1 // pred_check_branch
      %89 = sbr.rel (0) target = $region41
    $region40: #{tpu_custom_call.1} parent=1 // pred_region
      %91 = dma.done [#allocation9], 2048
    $region41: #{tpu_custom_call.1} parent=1 // pred_fallthru
      _
    // Predicated region
    $region42: #{tpu_custom_call.1} parent=1 // pred_check
      _
    $region43: #{tpu_custom_call.1} parent=1 // pred_check_branch
      %93 = sbr.rel (0) target = $region45
    $region44: #{tpu_custom_call.1} parent=1 // pred_region
      %95 = dma.done [#allocation9], 32
    $region45: #{tpu_custom_call.1} parent=1 // pred_fallthru
      _
    %v96 = vld [vmem:[#allocation2] sm:$0xf]
    %v97 = vld [vmem:[#allocation5] sm:$0xf]
    %v98 = vld [vmem:[#allocation5 + $0x4] sm:$0xf]
    %v99 = vld [vmem:[#allocation5 + $0x8] sm:$0xf]
    %v100 = vld [vmem:[#allocation5 + $0xc] sm:$0xf]
    %v101 = vld [vmem:[#allocation5 + $0x10] sm:$0xf]
    %v102 = vld [vmem:[#allocation5 + $0x14] sm:$0xf]
    %v103 = vld [vmem:[#allocation5 + $0x18] sm:$0xf]
    %v104 = vld [vmem:[#allocation5 + $0x1c] sm:$0xf]
    %v105 = vld [vmem:[#allocation5 + $0x20] sm:$0xf]
    %v106 = vld [vmem:[#allocation5 + $0x24] sm:$0xf]
    %v107 = vld [vmem:[#allocation5 + $0x28] sm:$0xf]
    %v108 = vld [vmem:[#allocation5 + $0x2c] sm:$0xf]
    %v109 = vld [vmem:[#allocation5 + $0x30] sm:$0xf]
    %v110 = vld [vmem:[#allocation5 + $0x34] sm:$0xf]
    %v111 = vld [vmem:[#allocation5 + $0x38] sm:$0xf]
    %v112 = vld [vmem:[#allocation5 + $0x3c] sm:$0xf]
    %v113 = vld [vmem:[#allocation7] sm:$0x1]
    %v115 = vperm.slane %v113, 0
    %v133 = vunpack.c.l.b16 %v97
    %v134 = vunpack.c.l.b16 %v98
    %v135 = vunpack.c.l.b16 %v99
    %v136 = vunpack.c.l.b16 %v100
    %v137 = vunpack.c.l.b16 %v101
    %v138 = vunpack.c.l.b16 %v102
    %v139 = vunpack.c.l.b16 %v103
    %v140 = vunpack.c.l.b16 %v104
    %v141 = vunpack.c.l.b16 %v105
    %v142 = vunpack.c.l.b16 %v106
    %v143 = vunpack.c.l.b16 %v107
    %v144 = vunpack.c.l.b16 %v108
    %v145 = vunpack.c.l.b16 %v109
    %v146 = vunpack.c.l.b16 %v110
    %v147 = vunpack.c.l.b16 %v111
    %v148 = vunpack.c.l.b16 %v112
    %v149 = vpack.c.b16 %v134, %v133
    %v150 = vpack.c.b16 %v136, %v135
    %v151 = vpack.c.b16 %v138, %v137
    %v152 = vpack.c.b16 %v140, %v139
    %v153 = vpack.c.b16 %v142, %v141
    %v154 = vpack.c.b16 %v144, %v143
    %v155 = vpack.c.b16 %v146, %v145
    %v156 = vpack.c.b16 %v148, %v147
    %165 = vmatpush.bf16.msra.mxu0 %v156
    %166 = vmatpush.bf16.msra.mxu0 %v155
    %167 = vmatpush.bf16.msra.mxu0 %v154
    %168 = vmatpush.bf16.msra.mxu0 %v153
    %169 = vmatpush.bf16.msra.mxu0 %v152
    %170 = vmatpush.bf16.msra.mxu0 %v151
    %171 = vmatpush.bf16.msra.mxu0 %v150
    %172 = vmatpush.bf16.msra.mxu0 %v149
    %173 = vmatmul.bf16.gmra.mxu0 %v96
    %v174 = vpop.f32.mrf.mxu0
    %v175 = vadd.f32 %v115, %v174
    %v176 = vpop.f32.mrf.mxu0
    %177 = vdwg.mxu0
    %v178 = vmax.f32 %v175, 0.0
    %v179 = vpack.c.bf16 %v178, %v178
    %v180 = vld [vmem:[#allocation8] sm:$0xff]
    %v181 = vld [vmem:[#allocation8 + $0x8] sm:$0xff]
    %v182 = vld [vmem:[#allocation8 + $0x10] sm:$0xff]
    %v183 = vld [vmem:[#allocation8 + $0x18] sm:$0xff]
    %v184 = vld [vmem:[#allocation8 + $0x20] sm:$0xff]
    %v185 = vld [vmem:[#allocation8 + $0x28] sm:$0xff]
    %v186 = vld [vmem:[#allocation8 + $0x30] sm:$0xff]
    %v187 = vld [vmem:[#allocation8 + $0x38] sm:$0xff]
    %v188 = vld [vmem:[#allocation8 + $0x40] sm:$0xff]
    %v189 = vld [vmem:[#allocation8 + $0x48] sm:$0xff]
    %v190 = vld [vmem:[#allocation8 + $0x50] sm:$0xff]
    %v191 = vld [vmem:[#allocation8 + $0x58] sm:$0xff]
    %v192 = vld [vmem:[#allocation8 + $0x60] sm:$0xff]
    %v193 = vld [vmem:[#allocation8 + $0x68] sm:$0xff]
    %v194 = vld [vmem:[#allocation8 + $0x70] sm:$0xff]
    %v195 = vld [vmem:[#allocation8 + $0x78] sm:$0xff]
    %v196 = vld [vmem:[#allocation10] sm:$0x3]
    %v198 = vperm.slane %v196, 0
    %v199 = vperm.slane %v196, 1
    %v218 = vunpack.c.l.b16 %v180
    %v219 = vunpack.c.h.b16 %v180
    %v220 = vunpack.c.l.b16 %v181
    %v221 = vunpack.c.h.b16 %v181
    %v222 = vunpack.c.l.b16 %v182
    %v223 = vunpack.c.h.b16 %v182
    %v224 = vunpack.c.l.b16 %v183
    %v225 = vunpack.c.h.b16 %v183
    %v226 = vunpack.c.l.b16 %v184
    %v227 = vunpack.c.h.b16 %v184
    %v228 = vunpack.c.l.b16 %v185
    %v229 = vunpack.c.h.b16 %v185
    %v230 = vunpack.c.l.b16 %v186
    %v231 = vunpack.c.h.b16 %v186
    %v232 = vunpack.c.l.b16 %v187
    %v233 = vunpack.c.h.b16 %v187
    %v234 = vunpack.c.l.b16 %v188
    %v235 = vunpack.c.h.b16 %v188
    %v236 = vunpack.c.l.b16 %v189
    %v237 = vunpack.c.h.b16 %v189
    %v238 = vunpack.c.l.b16 %v190
    %v239 = vunpack.c.h.b16 %v190
    %v240 = vunpack.c.l.b16 %v191
    %v241 = vunpack.c.h.b16 %v191
    %v242 = vunpack.c.l.b16 %v192
    %v243 = vunpack.c.h.b16 %v192
    %v244 = vunpack.c.l.b16 %v193
    %v245 = vunpack.c.h.b16 %v193
    %v246 = vunpack.c.l.b16 %v194
    %v247 = vunpack.c.h.b16 %v194
    %v248 = vunpack.c.l.b16 %v195
    %v249 = vunpack.c.h.b16 %v195
    %v250 = vpack.c.b16 %v220, %v218
    %v251 = vpack.c.b16 %v221, %v219
    %v252 = vpack.c.b16 %v224, %v222
    %v253 = vpack.c.b16 %v225, %v223
    %v254 = vpack.c.b16 %v228, %v226
    %v255 = vpack.c.b16 %v229, %v227
    %v256 = vpack.c.b16 %v232, %v230
    %v257 = vpack.c.b16 %v233, %v231
    %v258 = vpack.c.b16 %v236, %v234
    %v259 = vpack.c.b16 %v237, %v235
    %v260 = vpack.c.b16 %v240, %v238
    %v261 = vpack.c.b16 %v241, %v239
    %v262 = vpack.c.b16 %v244, %v242
    %v263 = vpack.c.b16 %v245, %v243
    %v264 = vpack.c.b16 %v248, %v246
    %v265 = vpack.c.b16 %v249, %v247
    %282 = vmatpush.bf16.msra.mxu0 %v264
    %283 = vmatpush.bf16.msra.mxu0 %v262
    %284 = vmatpush.bf16.msra.mxu0 %v260
    %285 = vmatpush.bf16.msra.mxu0 %v258
    %286 = vmatpush.bf16.msra.mxu0 %v256
    %287 = vmatpush.bf16.msra.mxu0 %v254
    %288 = vmatpush.bf16.msra.mxu0 %v252
    %289 = vmatpush.bf16.msra.mxu0 %v250
    %290 = vmatmul.bf16.gmra.mxu0 %v179
    %v291 = vpop.f32.mrf.mxu0
    %v292 = vadd.f32 %v198, %v291
    %v293 = vpop.f32.mrf.mxu0
    %294 = vdwg.mxu0
    %295 = vmatpush.bf16.msra.mxu0 %v265
    %296 = vmatpush.bf16.msra.mxu0 %v263
    %297 = vmatpush.bf16.msra.mxu0 %v261
    %298 = vmatpush.bf16.msra.mxu0 %v259
    %299 = vmatpush.bf16.msra.mxu0 %v257
    %300 = vmatpush.bf16.msra.mxu0 %v255
    %301 = vmatpush.bf16.msra.mxu0 %v253
    %302 = vmatpush.bf16.msra.mxu0 %v251
    %303 = vmatmul.bf16.gmra.mxu0 %v179
    %v304 = vpop.f32.mrf.mxu0
    %v305 = vadd.f32 %v199, %v304
    %v306 = vpop.f32.mrf.mxu0
    %307 = vdwg.mxu0
    %v308 = vmul.f32 %v305, 0.5
    %v309 = vmul.f32 %v308, 1.442695
    %v310 = vpow.pop %v309
    %v311 = vld [vmem:[%s5] sm:$0xf]
    %v312 = vunpack.c.l.bf16 %v311
    %v313 = vmul.f32 %v310, %v312
    %v314 = vadd.f32 %v292, %v313
    %315 = vst [vmem:[#allocation11] sm:$0xff] %v292
    %316 = vst [vmem:[#allocation11 + $0x8] sm:$0xff] %v305
    %317 = vst [vmem:[#allocation11 + $0x10] sm:$0xff] %v314
    // Predicated region
    $region46: #{tpu_custom_call.1} parent=1 // pred_check
      _
    $region47: #{tpu_custom_call.1} parent=1 // pred_check_branch
      %319 = sbr.rel (0) target = $region49
    $region48: #{tpu_custom_call.1} parent=1 // pred_region
      %321 = vsyncadd [#allocation4], 0
      %s323 = sshll.u32 [#allocation11], 4
      %s324 = int_to_ptr.vmem [resolvable:$true] %s323
      %s325 = sshll.u32 %s6, 4
      %s326 = int_to_ptr.hbm [resolvable:$true] %s325
      %328 = dma.vmem_to_hbm [thread:$0]  %s324, 384, %s326, [#allocation4]
    $region49: #{tpu_custom_call.1} parent=1 // pred_fallthru
      _
    // Predicated region
    $region50: #{tpu_custom_call.1} parent=1 // pred_check
      _
    $region51: #{tpu_custom_call.1} parent=1 // pred_check_branch
      %330 = sbr.rel (0) target = $region53
    $region52: #{tpu_custom_call.1} parent=1 // pred_region
      %332 = dma.done [#allocation4], 384
    $region53: #{tpu_custom_call.1} parent=1 // pred_fallthru
      _
    %333 = vsyncpa [#allocation3], 1
    %334 = vsyncpa [#allocation6], 1
    %335 = vsyncpa [#allocation9], 1
    %336 = vsyncpa [#allocation4], 1

</llo_original>
